<compile_context>
chip_gen: v7x
topology: tpu7x:2x2x1
jax: 0.10.0
libtpu: 0.0.40
codegen_flags: <defaults>
</compile_context>

<pallas_src>
import functools

import jax
import jax.numpy as jnp
from jax.experimental import pallas as pl
from jax.experimental.pallas import tpu as pltpu


def _round_up(v, m):
    return (v + m - 1) // m * m


def _fused_gcn_kernel(a_ref, x_ref, w_ref, b_ref, o_ref, h_ref, *,
                      num_layers, row_tile, neg_slope):
    """One grid step == one row-tile of one GraphConv layer.

    Grid: (num_layers, n_pad // row_tile) — layers outer (sequential),
    row tiles inner.

    a_ref: (tm, Np)   row slab of this layer's normalized adjacency
    x_ref: (Np, F)    padded, pre-projected input features (X @ W0)
    w_ref: (F, F)     zero-padded layer weight (identity for layer 0)
    b_ref: (1, F)     zero-padded layer bias (f32)
    o_ref: (tm, F)    output row tile (real data only at the last layer)
    h_ref: (2, Np, F) VMEM ping-pong hidden state carried across layers
    """
    layer = pl.program_id(0)
    row = pl.program_id(1)

    # Seed the resident hidden state once, at the very first grid step.
    @pl.when((layer == 0) & (row == 0))
    def _():
        h_ref[0] = x_ref[...]

    # Ping-pong slots: layer l reads slot l%2 and writes slot (l+1)%2, so every
    # row tile of layer l sees the complete previous-layer hidden state.
    src = layer % 2
    dst = (layer + 1) % 2

    # H_next[rows] = (A[rows, :] @ H) @ W + b, accumulated in f32 on the MXU.
    # The (A@H)@W association row-tiles without recomputation (A@(H@W) would
    # redo H@W once per row tile).
    ah = jnp.dot(a_ref[...], h_ref[src], preferred_element_type=jnp.float32)
    h = jnp.dot(ah.astype(w_ref.dtype), w_ref[...],
                preferred_element_type=jnp.float32)
    h = h + b_ref[...]

    # leaky_relu between all but the last layer; hidden state stays in VMEM.
    @pl.when(layer < num_layers - 1)
    def _():
        r0 = pl.multiple_of(row * row_tile, row_tile)
        h_ref[dst, pl.ds(r0, row_tile), :] = (
            jnp.where(h > 0, h, neg_slope * h).astype(h_ref.dtype))

    # Only the final layer's activations carry real data to HBM.  Earlier
    # layers' automatic o_ref writebacks contain don't-care bytes that the last
    # layer overwrites; that traffic is N*F per layer, negligible vs the N^2
    # adjacency stream.
    @pl.when(layer == num_layers - 1)
    def _():
        o_ref[...] = h.astype(o_ref.dtype)


def make_multi_layer_graph_conv(blocks, weights, biases, *,
                                compute_dtype=jnp.bfloat16,
                                negative_slope=0.01):
    """Builds a jitted forward(x) implementing MultiLayerGraphConv.forward.

    blocks:  list of dense normalized adjacency matrices [N, N]
    weights: list of [F_in_l, F_out_l]
    biases:  list of [F_out_l]

    Padding / stacking of A, W, b is done once here (hoisted out of the
    per-call path, per perf review).
    """
    num_layers = len(weights)
    assert len(blocks) == num_layers and len(biases) == num_layers
    n = blocks[0].shape[0]
    in_feats = int(weights[0].shape[0])
    dims = [in_feats] + [int(w.shape[1]) for w in weights]
    for l, w in enumerate(weights):
        assert w.shape[0] == dims[l], "weight fan-in mismatch"

    # ---- Padded geometry ----------------------------------------------------
    # The hidden state is padded only to the hidden widths; the wide input is
    # collapsed by the X @ W0 projection outside the kernel.
    f_pad = _round_up(max(dims[1:]), 128)

    sub = 16 if compute_dtype == jnp.bfloat16 else 8
    if n > 512:
        # Row-tile A: VMEM holds 2*tm*N of A instead of 2*N^2; pad the A@H
        # contraction dim to a lane/MXU-friendly multiple of 128.
        n_pad = _round_up(n, 128)
        row_tile = 256 if n_pad % 256 == 0 else 128
    else:
        n_pad = _round_up(max(n, sub), sub)
        row_tile = n_pad
    n_tiles = n_pad // row_tile

    # ---- One-time padded / stacked parameters -------------------------------
    a_stack = jnp.zeros((num_layers, n_pad, n_pad), compute_dtype)
    a_stack = a_stack.at[:, :n, :n].set(
        jnp.stack([jnp.asarray(a) for a in blocks]).astype(compute_dtype))

    # Layer 0's weight is applied outside the kernel; its in-kernel slot is I.
    w_stack = jnp.zeros((num_layers, f_pad, f_pad), compute_dtype)
    w_stack = w_stack.at[0].set(jnp.eye(f_pad, dtype=compute_dtype))
    b_stack = jnp.zeros((num_layers, 1, f_pad), jnp.float32)
    for l in range(num_layers):
        if l > 0:
            w_stack = w_stack.at[l, :dims[l], :dims[l + 1]].set(
                jnp.asarray(weights[l]).astype(compute_dtype))
        b_stack = b_stack.at[l, 0, :dims[l + 1]].set(
            jnp.asarray(biases[l]).astype(jnp.float32))
    w0 = jnp.asarray(weights[0]).astype(jnp.float32)

    # ---- Per-generation VMEM budget ------------------------------------------
    try:
        vmem_cap = int(pltpu.get_tpu_info().vmem_capacity_bytes)
    except Exception:
        vmem_cap = 64 * 1024 * 1024  # conservative (v7x-sized) fallback
    # ~96-100 MiB on v5e/v6e (128 MiB physical), ~48 MiB on v7x (64 MiB).
    vmem_limit = int(min((vmem_cap * 3) // 4, 100 * 1024 * 1024))

    kernel = functools.partial(_fused_gcn_kernel,
                               num_layers=num_layers,
                               row_tile=row_tile,
                               neg_slope=negative_slope)

    fused_call = pl.pallas_call(
        kernel,
        out_shape=jax.ShapeDtypeStruct((n_pad, f_pad), jnp.float32),
        grid=(num_layers, n_tiles),
        in_specs=[
            # Per-layer adjacency, streamed one (row_tile, n_pad) slab per step.
            pl.BlockSpec((None, row_tile, n_pad), lambda l, r: (l, r, 0)),
            # Pre-projected input features: constant block index -> loaded once.
            pl.BlockSpec((n_pad, f_pad), lambda l, r: (0, 0)),
            # Per-layer weight / bias (constant across row tiles).
            pl.BlockSpec((None, f_pad, f_pad), lambda l, r: (l, 0, 0)),
            pl.BlockSpec((None, 1, f_pad), lambda l, r: (l, 0, 0)),
        ],
        out_specs=pl.BlockSpec((row_tile, f_pad), lambda l, r: (r, 0)),
        scratch_shapes=[pltpu.VMEM((2, n_pad, f_pad), compute_dtype)],
        compiler_params=pltpu.CompilerParams(
            # Layers are strictly sequential; row tiles share the ping-pong
            # hidden scratch, so both axes stay "arbitrary".
            dimension_semantics=("arbitrary", "arbitrary"),
            vmem_limit_bytes=vmem_limit,
        ),
    )

    hidden0 = dims[1]
    out_dim = dims[-1]

    @jax.jit
    def forward(x):
        # Layer-0 projection outside the kernel: collapses the (possibly wide)
        # input down to the hidden width before the N^2 work starts.
        h0 = jnp.dot(x.astype(jnp.float32), w0,
                     preferred_element_type=jnp.float32)
        x_pad = jnp.zeros((n_pad, f_pad), compute_dtype)
        x_pad = x_pad.at[:n, :hidden0].set(h0.astype(compute_dtype))
        out_pad = fused_call(a_stack, x_pad, w_stack, b_stack)
        return out_pad[:n, :out_dim]

    # TODO(synk): for large/sparse graphs add a block-sparse adjacency path
    # (scalar-prefetched per-row-tile nonzero-column lists) and a v7x core_map
    # split of row tiles; the dense row-tiled stream is the practical path for
    # dense normalized adjacencies.
    return forward


def make_normalized_adj(key, n, dtype=jnp.float32):
    """Build a symmetric random adjacency and normalize: D^-1/2 (A + I) D^-1/2."""
    raw = jax.random.uniform(key, (n, n))
    adj = (raw > 0.7).astype(dtype)
    adj = jnp.maximum(adj, adj.T)            # symmetric
    adj = adj + jnp.eye(n, dtype=dtype)      # self loops
    deg = jnp.sum(adj, axis=1)
    d_inv_sqrt = 1.0 / jnp.sqrt(deg)
    return (adj * d_inv_sqrt[:, None]) * d_inv_sqrt[None, :]


if __name__ == "__main__":
    key = jax.random.PRNGKey(0)

    # Small shapes consistent with the module.
    num_nodes = 32
    in_feats = 16
    hidden_dims = [32, 8]
    num_layers = 2
    assert len(hidden_dims) == num_layers

    k_x, k_a0, k_a1, k_w0, k_w1, k_b0, k_b1 = jax.random.split(key, 7)

    x = jax.random.normal(k_x, (num_nodes, in_feats), dtype=jnp.float32)
    blocks = [
        make_normalized_adj(k_a0, num_nodes),
        make_normalized_adj(k_a1, num_nodes),
    ]

    # Deterministic Glorot-uniform-ish weights, small random bias.
    dims = [in_feats] + hidden_dims
    wkeys = [k_w0, k_w1]
    bkeys = [k_b0, k_b1]
    weights, biases = [], []
    for l in range(num_layers):
        fan_in, fan_out = dims[l], dims[l + 1]
        limit = (6.0 / (fan_in + fan_out)) ** 0.5
        weights.append(jax.random.uniform(
            wkeys[l], (fan_in, fan_out), minval=-limit, maxval=limit,
            dtype=jnp.float32))
        biases.append(0.01 * jax.random.normal(bkeys[l], (fan_out,),
                                               dtype=jnp.float32))

    # Pure-JAX reference (matches the PyTorch forward with GraphConv layers).
    ref = x
    for l in range(num_layers):
        ref = blocks[l] @ ref @ weights[l] + biases[l]
        if l != num_layers - 1:
            ref = jnp.where(ref > 0, ref, 0.01 * ref)

    # f32 compute path: tight check.
    fwd_f32 = make_multi_layer_graph_conv(blocks, weights, biases,
                                          compute_dtype=jnp.float32)
    out_f32 = jax.block_until_ready(fwd_f32(x))
    assert out_f32.shape == (num_nodes, hidden_dims[-1])
    assert jnp.allclose(out_f32, ref, atol=1e-4, rtol=1e-4)

    # bf16 default fast path (f32 MXU accumulation): loose check.
    # NOTE: bf16 error on the d^-1/2-normalized adjacency grows with N/degree;
    # re-verify tolerances at target graph sizes.
    fwd_bf16 = make_multi_layer_graph_conv(blocks, weights, biases)
    out_bf16 = jax.block_until_ready(fwd_bf16(x))
    assert out_bf16.shape == (num_nodes, hidden_dims[-1])
    assert jnp.allclose(out_bf16, ref, atol=1e-1, rtol=1e-1)

    print("KERNEL_OK")
</pallas_src>

<mosaic_0001>
module attributes {stable_mosaic.version = 11 : i64} {
  func.func @_fused_gcn_kernel(%arg0: i32, %arg1: i32, %arg2: memref<1x32x32xf32, #tpu.memory_space<vmem>>, %arg3: memref<32x128xf32, #tpu.memory_space<vmem>>, %arg4: memref<1x128x128xf32, #tpu.memory_space<vmem>>, %arg5: memref<1x1x128xf32, #tpu.memory_space<vmem>>, %arg6: memref<32x128xf32, #tpu.memory_space<vmem>>, %arg7: memref<2x32x128xf32, #tpu.memory_space<vmem>>) attributes {dimension_semantics = [#tpu.dimension_semantics<arbitrary>, #tpu.dimension_semantics<arbitrary>], iteration_bounds = array<i64: 2, 1>, scalar_prefetch = 0 : i64, scratch_operands = 1 : i64, tpu.core_type = #tpu.core_type<tc>, window_params = [{transform_indices = @transform_0, window_bounds = array<i64: 1, 32, 32>}, {pipeline_mode = #tpu.pipeline_mode<synchronous>, transform_indices = @transform_1, window_bounds = array<i64: 32, 128>}, {transform_indices = @transform_2, window_bounds = array<i64: 1, 128, 128>}, {transform_indices = @transform_3, window_bounds = array<i64: 1, 1, 128>}, {transform_indices = @transform_4, window_bounds = array<i64: 32, 128>}]} {
    %c0_i32 = arith.constant 0 : i32
    %0 = arith.cmpi eq, %arg0, %c0_i32 : i32
    %c0_i32_0 = arith.constant 0 : i32
    %1 = arith.cmpi eq, %arg1, %c0_i32_0 : i32
    %2 = arith.andi %0, %1 : i1
    %3 = arith.extui %2 : i1 to i32
    %c0_i32_1 = arith.constant 0 : i32
    %4 = arith.cmpi ne, %3, %c0_i32_1 : i32
    scf.if %4 {
      %c0_28 = arith.constant 0 : index
      %c0_29 = arith.constant 0 : index
      %45 = vector.load %arg3[%c0_28, %c0_29] : memref<32x128xf32, #tpu.memory_space<vmem>>, vector<32x128xf32>
      %c0_30 = arith.constant 0 : index
      %c0_31 = arith.constant 0 : index
      %c0_32 = arith.constant 0 : index
      %46 = vector.load %arg7[%c0_30, %c0_31, %c0_32] : memref<2x32x128xf32, #tpu.memory_space<vmem>>, vector<1x32x128xf32>
      %47 = vector.shape_cast %46 : vector<1x32x128xf32> to vector<32x128xf32>
      %48 = vector.shape_cast %45 : vector<32x128xf32> to vector<1x32x128xf32>
      tpu.vector_store %arg7[%c0_30, %c0_31, %c0_32], %48 {strides = array<i32>} : memref<2x32x128xf32, #tpu.memory_space<vmem>>, vector<1x32x128xf32>,
    } else {
    }
    %c2_i32 = arith.constant 2 : i32
    %c0_i32_2 = arith.constant 0 : i32
    %5 = arith.cmpi eq, %c2_i32, %c0_i32_2 : i32
    %c1_i32 = arith.constant 1 : i32
    %6 = arith.select %5, %c1_i32, %c2_i32 : i32
    %7 = arith.remsi %arg0, %6 : i32
    %c0_i32_3 = arith.constant 0 : i32
    %8 = arith.cmpi ne, %7, %c0_i32_3 : i32
    %c0_i32_4 = arith.constant 0 : i32
    %9 = arith.cmpi slt, %7, %c0_i32_4 : i32
    %c0_i32_5 = arith.constant 0 : i32
    %10 = arith.cmpi slt, %6, %c0_i32_5 : i32
    %11 = arith.xori %9, %10 : i1
    %12 = arith.andi %11, %8 : i1
    %13 = arith.addi %7, %6 : i32
    %14 = arith.select %12, %13, %7 : i32
    %c1_i32_6 = arith.constant 1 : i32
    %15 = arith.addi %arg0, %c1_i32_6 : i32
    %c2_i32_7 = arith.constant 2 : i32
    %c0_i32_8 = arith.constant 0 : i32
    %16 = arith.cmpi eq, %c2_i32_7, %c0_i32_8 : i32
    %c1_i32_9 = arith.constant 1 : i32
    %17 = arith.select %16, %c1_i32_9, %c2_i32_7 : i32
    %18 = arith.remsi %15, %17 : i32
    %c0_i32_10 = arith.constant 0 : i32
    %19 = arith.cmpi ne, %18, %c0_i32_10 : i32
    %c0_i32_11 = arith.constant 0 : i32
    %20 = arith.cmpi slt, %18, %c0_i32_11 : i32
    %c0_i32_12 = arith.constant 0 : i32
    %21 = arith.cmpi slt, %17, %c0_i32_12 : i32
    %22 = arith.xori %20, %21 : i1
    %23 = arith.andi %22, %19 : i1
    %24 = arith.addi %18, %17 : i32
    %25 = arith.select %23, %24, %18 : i32
    %c0 = arith.constant 0 : index
    %c0_13 = arith.constant 0 : index
    %c0_14 = arith.constant 0 : index
    %26 = vector.load %arg2[%c0, %c0_13, %c0_14] : memref<1x32x32xf32, #tpu.memory_space<vmem>>, vector<1x32x32xf32>
    %27 = vector.shape_cast %26 : vector<1x32x32xf32> to vector<32x32xf32>
    %28 = arith.index_cast %14 : i32 to index
    %c0_15 = arith.constant 0 : index
    %c0_16 = arith.constant 0 : index
    %29 = vector.load %arg7[%28, %c0_15, %c0_16] : memref<2x32x128xf32, #tpu.memory_space<vmem>>, vector<1x32x128xf32>
    %30 = vector.shape_cast %29 : vector<1x32x128xf32> to vector<32x128xf32>
    %cst = arith.constant dense<0.000000e+00> : vector<32x128xf32>
    %31 = tpu.matmul %27, %30, %cst {dimension_numbers = #tpu.dot_dimension_numbers<[1], [0], [0], [1], [0, 0, 1, 1], [], []>} : vector<32x32xf32>, vector<32x128xf32>, vector<32x128xf32> -> vector<32x128xf32>
    %c0_17 = arith.constant 0 : index
    %c0_18 = arith.constant 0 : index
    %c0_19 = arith.constant 0 : index
    %32 = vector.load %arg4[%c0_17, %c0_18, %c0_19] : memref<1x128x128xf32, #tpu.memory_space<vmem>>, vector<1x128x128xf32>
    %33 = vector.shape_cast %32 : vector<1x128x128xf32> to vector<128x128xf32>
    %cst_20 = arith.constant dense<0.000000e+00> : vector<32x128xf32>
    %34 = tpu.matmul %31, %33, %cst_20 {dimension_numbers = #tpu.dot_dimension_numbers<[1], [0], [0], [1], [0, 0, 1, 1], [], []>} : vector<32x128xf32>, vector<128x128xf32>, vector<32x128xf32> -> vector<32x128xf32>
    %c0_21 = arith.constant 0 : index
    %c0_22 = arith.constant 0 : index
    %c0_23 = arith.constant 0 : index
    %35 = vector.load %arg5[%c0_21, %c0_22, %c0_23] : memref<1x1x128xf32, #tpu.memory_space<vmem>>, vector<1x1x128xf32>
    %36 = vector.shape_cast %35 : vector<1x1x128xf32> to vector<1x128xf32>
    %37 = vector.broadcast %36 : vector<1x128xf32> to vector<32x128xf32>
    %38 = arith.addf %34, %37 : vector<32x128xf32>
    %c1_i32_24 = arith.constant 1 : i32
    %39 = arith.cmpi slt, %arg0, %c1_i32_24 : i32
    %40 = arith.extui %39 : i1 to i32
    %c0_i32_25 = arith.constant 0 : i32
    %41 = arith.cmpi ne, %40, %c0_i32_25 : i32
    scf.if %41 {
      %c32_i32 = arith.constant 32 : i32
      %45 = arith.muli %arg1, %c32_i32 : i32
      %46 = tpu.assume_multiple %45, 32 : i32
      %cst_28 = arith.constant 0.000000e+00 : f32
      %47 = vector.broadcast %cst_28 : f32 to vector<32x128xf32>
      %48 = arith.cmpf ogt, %38, %47 : vector<32x128xf32>
      %cst_29 = arith.constant 0.00999999977 : f32
      %49 = vector.broadcast %cst_29 : f32 to vector<32x128xf32>
      %50 = arith.mulf %49, %38 : vector<32x128xf32>
      %51 = arith.select %48, %38, %50 : vector<32x128xi1>, vector<32x128xf32>
      %52 = arith.index_cast %25 : i32 to index
      %53 = arith.index_cast %46 : i32 to index
      %c0_30 = arith.constant 0 : index
      %54 = vector.load %arg7[%52, %53, %c0_30] : memref<2x32x128xf32, #tpu.memory_space<vmem>>, vector<1x32x128xf32>
      %55 = vector.shape_cast %54 : vector<1x32x128xf32> to vector<32x128xf32>
      %56 = vector.shape_cast %51 : vector<32x128xf32> to vector<1x32x128xf32>
      tpu.vector_store %arg7[%52, %53, %c0_30], %56 {strides = array<i32>} : memref<2x32x128xf32, #tpu.memory_space<vmem>>, vector<1x32x128xf32>,
    } else {
    }
    %c1_i32_26 = arith.constant 1 : i32
    %42 = arith.cmpi eq, %arg0, %c1_i32_26 : i32
    %43 = arith.extui %42 : i1 to i32
    %c0_i32_27 = arith.constant 0 : i32
    %44 = arith.cmpi ne, %43, %c0_i32_27 : i32
    scf.if %44 {
      %c0_28 = arith.constant 0 : index
      %c0_29 = arith.constant 0 : index
      %45 = vector.load %arg6[%c0_28, %c0_29] : memref<32x128xf32, #tpu.memory_space<vmem>>, vector<32x128xf32>
      tpu.vector_store %arg6[%c0_28, %c0_29], %38 {strides = array<i32>} : memref<32x128xf32, #tpu.memory_space<vmem>>, vector<32x128xf32>,
    } else {
    }
    return
  }
  func.func @transform_0(%arg0: i32, %arg1: i32) -> (i32, i32, i32) {
    %c0_i32 = arith.constant 0 : i32
    %c0_i32_0 = arith.constant 0 : i32
    return %arg0, %arg1, %c0_i32 : i32, i32, i32
  }
  func.func @transform_1(%arg0: i32, %arg1: i32) -> (i32, i32) {
    %c0_i32 = arith.constant 0 : i32
    %c0_i32_0 = arith.constant 0 : i32
    %c0_i32_1 = arith.constant 0 : i32
    return %c0_i32, %c0_i32_0 : i32, i32
  }
  func.func @transform_2(%arg0: i32, %arg1: i32) -> (i32, i32, i32) {
    %c0_i32 = arith.constant 0 : i32
    %c0_i32_0 = arith.constant 0 : i32
    %c0_i32_1 = arith.constant 0 : i32
    return %arg0, %c0_i32, %c0_i32_0 : i32, i32, i32
  }
  func.func @transform_3(%arg0: i32, %arg1: i32) -> (i32, i32, i32) {
    %c0_i32 = arith.constant 0 : i32
    %c0_i32_0 = arith.constant 0 : i32
    %c0_i32_1 = arith.constant 0 : i32
    return %arg0, %c0_i32, %c0_i32_0 : i32, i32, i32
  }
  func.func @transform_4(%arg0: i32, %arg1: i32) -> (i32, i32) {
    %c0_i32 = arith.constant 0 : i32
    %c0_i32_0 = arith.constant 0 : i32
    return %arg1, %c0_i32 : i32, i32
  }
}

</mosaic_0001>

<llo_original>
// kernel: forward.1
$region0: #{forward.1}
  #allocation0 [shape = 'u32[]', space=smem, size = 0x4, offset = 0x4, fixed_abs, tag = 'smem constant byte address 0x4 - core index']
  #allocation1 [shape = 'u32[144,128]{1,0:T(1,128)}', space=vmem, size = 0x12000, scoped, tag = 'internal scratch']
  #allocation2 [shape = 'f32[2,32,128]{2,1,0:T(8,128)}', space=vmem, size = 0x8000, scoped, tag = 'scratch operand']
  %s0 = inlined_call_operand.vmem [shape: f32[2,32,32], index: 0, kind: input, shape index: {}]
  %s1 = inlined_call_operand.vmem [shape: f32[32,128], index: 1, kind: input, shape index: {}]
  %s2 = inlined_call_operand.hbm [shape: f32[2,128,128], index: 2, kind: input, shape index: {}]
  %s3 = inlined_call_operand.vmem [shape: f32[2,1,128], index: 3, kind: input, shape index: {}]
  %s4 = inlined_call_operand.vmem [shape: f32[32,128], index: 4, kind: output, shape index: {}]
  %s5 = sld [smem:[#allocation0]]
  $region65: #{forward.1} parent=0
    _
  %s7 = ssub.s32 1, %s5
  %s8 = scalar_select 0, %s7, %s5
  $region1: #{forward.1} parent=0
    #allocation3 [shape = 'u8[131072]{0}', space=vmem, size = 0x20000, scoped, tag = 'input window, operand 2']
    #allocation4 [shape = 's32[2]{0}', space=sflag, size = 0x8, scoped, tag = 'scoped memory for forward.1']
    %9 = vsyncpa [#allocation4], 0
    %s10 = scalar_lea.sflag [#allocation4], 1
    %11 = vsyncpa %s10, 0
    loop: start=0, step=1, limit=4
    $region2: #{forward.1} parent=1 // loop_pre_header
      _
    $region3: #{forward.1} parent=1 // loop_header
      %s13 = sphi 0, %s17
      %p14 = scmp.ge.s32.totalorder %s13, 4
      %s20 = sphi 0, %s32
      %s21 = sphi 0, %s28
      %s22 = sphi 0, %s20
      %s23 = sphi 0, %s21
      %s24 = sphi 0, %s22
      %s25 = sphi 0, %s23
      %s37 = sphi 0, %s39
      %s40 = sphi 0, %s37
      %s41 = sphi 0, %s40
      %s57 = sphi 0, %s41
      %s61 = sphi 0, %s61
      %s63 = sphi 0, %s61
      %s64 = sphi 0, %s63
      %s78 = sphi 0, %s64
      %s84 = sphi 0, %s86
      %s87 = sphi 0, %s84
      %s88 = sphi 0, %s87
      %s104 = sphi 0, %s88
      %s110 = sphi 0, %s112
      %s113 = sphi 0, %s110
      %s114 = sphi 0, %s113
      %s130 = sphi 0, %s114
      %s136 = sphi 0, %s138
      %s139 = sphi 0, %s136
      %s140 = sphi 0, %s139
      %s156 = sphi 0, %s140
    $region4: #{forward.1} parent=1 // loop_header_branch
      %16 = sbr.rel (%p14) target = $region8
    $region5: #{forward.1} parent=1 // loop_body
      %s18 = ssub.s32 %s13, 1
      %s19 = ssub.s32 %s13, 2
      %s26 = sadd.s32 1, %s21
      %p27 = scmp.ge.s32.totalorder %s26, 1
      %s28 = scalar_select %p27, 0, %s26
      %s29 = sadd.s32 1, %s20
      %s30 = scalar_select %p27, %s29, %s20
      %p31 = scmp.ge.s32.totalorder %s30, 2
      %s32 = scalar_select %p31, 0, %s30
      %s33 = ssub.s32 %s20, %s32
      %s34 = ssub.s32 %s21, %s28
      %s35 = sor.u32 %s33, %s34
      %p36 = scmp.eq.s32.totalorder %s35, 0
      %s38 = sadd.s32 %s37, 1
      %s39 = scalar_select %p36, %s37, %s38
      %p42 = pneg %p36
      %p43 = scmp.eq.s32.totalorder %s13, 1
      %p44 = por %p42, %p43
      %p45 = scmp.ne.s32.totalorder %s37, %s40
      %p46 = scmp.eq.s32.totalorder %s13, 0
      %p47 = por %p45, %p46
      %p48 = scmp.ne.s32.totalorder %s37, %s40
      %p49 = scmp.eq.s32.totalorder %s18, 1
      %p50 = por %p48, %p49
      %p51 = scmp.ne.s32.totalorder %s40, %s41
      %p52 = scmp.eq.s32.totalorder %s18, 0
      %p53 = por %p51, %p52
      %p54 = scmp.ne.s32.totalorder %s40, %s41
      %p55 = scmp.eq.s32.totalorder %s19, 1
      %p56 = por %p54, %p55
      %p58 = scmp.ne.s32.totalorder %s41, %s57
      %p59 = scmp.eq.s32.totalorder %s19, 0
      %p60 = por %p58, %p59
      %s62 = sadd.s32 %s61, 1
      %p65 = scmp.eq.s32.totalorder %s13, 1
      %p66 = scmp.ne.s32.totalorder %s61, %s63
      %p67 = scmp.eq.s32.totalorder %s13, 0
      %p68 = por %p66, %p67
      %p69 = scmp.ne.s32.totalorder %s61, %s63
      %p70 = scmp.eq.s32.totalorder %s18, 1
      %p71 = por %p69, %p70
      %p72 = scmp.ne.s32.totalorder %s63, %s64
      %p73 = scmp.eq.s32.totalorder %s18, 0
      %p74 = por %p72, %p73
      %p75 = scmp.ne.s32.totalorder %s63, %s64
      %p76 = scmp.eq.s32.totalorder %s19, 1
      %p77 = por %p75, %p76
      %p79 = scmp.ne.s32.totalorder %s64, %s78
      %p80 = scmp.eq.s32.totalorder %s19, 0
      %p81 = por %p79, %p80
      %s82 = ssub.s32 %s20, %s32
      %p83 = scmp.eq.s32.totalorder %s82, 0
      %s85 = sadd.s32 %s84, 1
      %s86 = scalar_select %p83, %s84, %s85
      %p89 = pneg %p83
      %p90 = scmp.eq.s32.totalorder %s13, 1
      %p91 = por %p89, %p90
      %p92 = scmp.ne.s32.totalorder %s84, %s87
      %p93 = scmp.eq.s32.totalorder %s13, 0
      %p94 = por %p92, %p93
      %p95 = scmp.ne.s32.totalorder %s84, %s87
      %p96 = scmp.eq.s32.totalorder %s18, 1
      %p97 = por %p95, %p96
      %p98 = scmp.ne.s32.totalorder %s87, %s88
      %p99 = scmp.eq.s32.totalorder %s18, 0
      %p100 = por %p98, %p99
      %p101 = scmp.ne.s32.totalorder %s87, %s88
      %p102 = scmp.eq.s32.totalorder %s19, 1
      %p103 = por %p101, %p102
      %p105 = scmp.ne.s32.totalorder %s88, %s104
      %p106 = scmp.eq.s32.totalorder %s19, 0
      %p107 = por %p105, %p106
      %s108 = ssub.s32 %s20, %s32
      %p109 = scmp.eq.s32.totalorder %s108, 0
      %s111 = sadd.s32 %s110, 1
      %s112 = scalar_select %p109, %s110, %s111
      %p115 = pneg %p109
      %p116 = scmp.eq.s32.totalorder %s13, 1
      %p117 = por %p115, %p116
      %p118 = scmp.ne.s32.totalorder %s110, %s113
      %p119 = scmp.eq.s32.totalorder %s13, 0
      %p120 = por %p118, %p119
      %p121 = scmp.ne.s32.totalorder %s110, %s113
      %p122 = scmp.eq.s32.totalorder %s18, 1
      %p123 = por %p121, %p122
      %p124 = scmp.ne.s32.totalorder %s113, %s114
      %p125 = scmp.eq.s32.totalorder %s18, 0
      %p126 = por %p124, %p125
      %p127 = scmp.ne.s32.totalorder %s113, %s114
      %p128 = scmp.eq.s32.totalorder %s19, 1
      %p129 = por %p127, %p128
      %p131 = scmp.ne.s32.totalorder %s114, %s130
      %p132 = scmp.eq.s32.totalorder %s19, 0
      %p133 = por %p131, %p132
      %s134 = ssub.s32 %s21, %s28
      %p135 = scmp.eq.s32.totalorder %s134, 0
      %s137 = sadd.s32 %s136, 1
      %s138 = scalar_select %p135, %s136, %s137
      %p141 = pneg %p135
      %p142 = scmp.eq.s32.totalorder %s13, 1
      %p143 = por %p141, %p142
      %p144 = scmp.ne.s32.totalorder %s136, %s139
      %p145 = scmp.eq.s32.totalorder %s13, 0
      %p146 = por %p144, %p145
      %p147 = scmp.ne.s32.totalorder %s136, %s139
      %p148 = scmp.eq.s32.totalorder %s18, 1
      %p149 = por %p147, %p148
      %p150 = scmp.ne.s32.totalorder %s139, %s140
      %p151 = scmp.eq.s32.totalorder %s18, 0
      %p152 = por %p150, %p151
      %p153 = scmp.ne.s32.totalorder %s139, %s140
      %p154 = scmp.eq.s32.totalorder %s19, 1
      %p155 = por %p153, %p154
      %p157 = scmp.ne.s32.totalorder %s140, %s156
      %p158 = scmp.eq.s32.totalorder %s19, 0
      %p159 = por %p157, %p158
      %p160 = scmp.le.s32.totalorder 1, %s13
      %p161 = scmp.lt.s32.totalorder %s13, 3
      %p162 = pnand %p160, %p161
      %p163 = pneg %p162
      // Predicated region
      $region9: #{forward.1} parent=5 // pred_check
        _
      $region10: #{forward.1} parent=5 // pred_check_branch
        %165 = sbr.rel (%p162) target = $region12
      $region11: #{forward.1} parent=5 // pred_region
        %s166 = ssub.s32 %s13, 1
        // Predicated region
        $region13: #{forward.1} parent=11 // pred_check
          %p167 = pneg %p74
        $region14: #{forward.1} parent=11 // pred_check_branch
          %169 = sbr.rel (%p167) target = $region16
        $region15: #{forward.1} parent=11 // pred_region
          _
        $region16: #{forward.1} parent=11 // pred_fallthru
          _
      $region12: #{forward.1} parent=5 // pred_fallthru
        _
      %p170 = scmp.lt.s32.totalorder %s13, 2
      // Predicated region
      $region17: #{forward.1} parent=5 // pred_check
        %p171 = pneg %p170
      $region18: #{forward.1} parent=5 // pred_check_branch
        %173 = sbr.rel (%p171) target = $region20
      $region19: #{forward.1} parent=5 // pred_region
        // Predicated region
        $region21: #{forward.1} parent=19 // pred_check
          %p174 = pneg %p47
        $region22: #{forward.1} parent=19 // pred_check_branch
          %176 = sbr.rel (%p174) target = $region24
        $region23: #{forward.1} parent=19 // pred_region
          %s177 = smul.u32 4, %s21
          %p178 = scmp.lt.s32.totalorder %s20, 1
          %s179 = scalar_select %p178, %s20, 1
          %p180 = scmp.lt.s32.totalorder %s177, 3
          %s181 = scalar_select %p180, %s177, 3
          %s182 = smul.addr %s179, 4
          %s183 = sadd.s32 %s181, %s182
          %s184 = smul.addr %s183, 8
          %s185 = scalar_lea.vmem %s0, %s184
          %s186 = smul.u32 4, %s21
        $region24: #{forward.1} parent=19 // pred_fallthru
          _
        // Predicated region
        $region25: #{forward.1} parent=19 // pred_check
          %p187 = pneg %p94
        $region26: #{forward.1} parent=19 // pred_check_branch
          %189 = sbr.rel (%p187) target = $region28
        $region27: #{forward.1} parent=19 // pred_region
          %s190 = sand.u32 %s84, 1
          %s191 = scalar_lea.sflag [#allocation4], %s190
          %s192 = sand.u32 %s84, 1
          %s193 = smul.addr %s192, 128
          %s194 = scalar_lea.vmem [#allocation3], %s193
          %s196 = ssub.s32 2048, 2048
          %197 = vsyncadd %s191, %s196
          %s198 = smul.addr %s20, 16
          %s199 = smul.addr %s198, 128
          %s200 = scalar_lea.hbm %s2, %s199
          %s201 = sshll.u32 %s194, 4
          %s202 = int_to_ptr.vmem [resolvable:$true] %s201
          %207 = dma.hbm_to_vmem [thread:$0]  %s200, 2048, %s202, %s191, 128, 128, 8
        $region28: #{forward.1} parent=19 // pred_fallthru
          _
        // Predicated region
        $region29: #{forward.1} parent=19 // pred_check
          %p208 = pneg %p120
        $region30: #{forward.1} parent=19 // pred_check_branch
          %210 = sbr.rel (%p208) target = $region32
        $region31: #{forward.1} parent=19 // pred_region
          %p211 = scmp.lt.s32.totalorder %s20, 1
          %s212 = scalar_select %p211, %s20, 1
          %s213 = scalar_lea.vmem %s3, %s212
        $region32: #{forward.1} parent=19 // pred_fallthru
          _
      $region20: #{forward.1} parent=5 // pred_fallthru
        _
      %p214 = scmp.le.s32.totalorder 1, %s13
      %p215 = scmp.lt.s32.totalorder %s13, 3
      %p216 = pnand %p214, %p215
      %p217 = pneg %p216
      // Predicated region
      $region33: #{forward.1} parent=5 // pred_check
        _
      $region34: #{forward.1} parent=5 // pred_check_branch
        %219 = sbr.rel (%p216) target = $region36
      $region35: #{forward.1} parent=5 // pred_region
        %s220 = ssub.s32 %s13, 1
        %s221 = sand.u32 %s87, 1
        %s222 = scalar_lea.sflag [#allocation4], %s221
        %s223 = sand.u32 %s87, 1
        %s224 = smul.addr %s223, 128
        %s225 = scalar_lea.vmem [#allocation3], %s224
        // Predicated region
        $region37: #{forward.1} parent=35 // pred_check
          %p226 = pneg %p100
        $region38: #{forward.1} parent=35 // pred_check_branch
          %228 = sbr.rel (%p226) target = $region40
        $region39: #{forward.1} parent=35 // pred_region
          %229 = dma.done %s222, 2048
        $region40: #{forward.1} parent=35 // pred_fallthru
          _
        %s230 = smul.u32 4, %s23
        %p231 = scmp.lt.s32.totalorder %s22, 1
        %s232 = scalar_select %p231, %s22, 1
        %p233 = scmp.lt.s32.totalorder %s230, 3
        %s234 = scalar_select %p233, %s230, 3
        %s235 = smul.addr %s232, 4
        %s236 = sadd.s32 %s234, %s235
        %s237 = smul.addr %s236, 8
        %s238 = scalar_lea.vmem %s0, %s237
        %p239 = pneg %p53
        %p240 = pneg %p50
        %p241 = pneg %p74
        %p242 = pneg %p71
        %s243 = sand.u32 %s87, 1
        %s244 = scalar_lea.sflag [#allocation4], %s243
        %s245 = sand.u32 %s87, 1
        %s246 = smul.addr %s245, 128
        %s247 = scalar_lea.vmem [#allocation3], %s246
        %p248 = pneg %p100
        %p249 = pneg %p97
        %p250 = scmp.lt.s32.totalorder %s22, 1
        %s251 = scalar_select %p250, %s22, 1
        %s252 = scalar_lea.vmem %s3, %s251
        %p253 = pneg %p126
        %p254 = pneg %p123
        %p255 = pneg %p152
        %p256 = pneg %p149
        %s257 = smul.u32 4, %s23
        %p258 = scmp.lt.s32.totalorder %s257, 3
        %s259 = scalar_select %p258, %s257, 3
        %s260 = smul.addr %s259, 8
        %s261 = scalar_lea.vmem %s4, %s260
        %s262 = smul.u32 4, %s23
        %p263 = scmp.lt.s32.totalorder %s22, 1
        %s264 = scalar_select %p263, %s22, 1
        %p265 = scmp.lt.s32.totalorder %s262, 3
        %s266 = scalar_select %p265, %s262, 3
        %s267 = smul.addr %s264, 4
        %s268 = sadd.s32 %s266, %s267
        %s269 = smul.addr %s268, 8
        %s270 = scalar_lea.vmem %s0, %s269
        %s271 = smul.u32 4, %s23
        %p272 = scmp.lt.s32.totalorder %s22, 1
        %s273 = scalar_select %p272, %s22, 1
        %s274 = scalar_lea.vmem %s3, %s273
        %s275 = smul.u32 4, %s23
        %p276 = scmp.lt.s32.totalorder %s275, 3
        %s277 = scalar_select %p276, %s275, 3
        %s278 = smul.addr %s277, 8
        %s279 = scalar_lea.vmem %s4, %s278
        %s280 = smul.u32 4, %s23
        %p281 = scmp.eq.s32.totalorder %s22, 0
        %p282 = scmp.eq.s32.totalorder %s23, 0
        %p283 = pnand %p281, %p282
        %p284 = pneg %p283
        // Predicated region
        $region41: #{forward.1} parent=35 // pred_check
          _
        $region42: #{forward.1} parent=35 // pred_check_branch
          %286 = sbr.rel (%p283) target = $region44
        $region43: #{forward.1} parent=35 // pred_region
          %v287 = vld [vmem:[%s1] sm:$0xff]
          %v288 = vld [vmem:[%s1 + $0x8] sm:$0xff]
          %v289 = vld [vmem:[%s1 + $0x10] sm:$0xff]
          %v290 = vld [vmem:[%s1 + $0x18] sm:$0xff]
          %291 = vst [vmem:[#allocation2] sm:$0xff] %v287
          %292 = vst [vmem:[#allocation2 + $0x8] sm:$0xff] %v288
          %293 = vst [vmem:[#allocation2 + $0x10] sm:$0xff] %v289
          %294 = vst [vmem:[#allocation2 + $0x18] sm:$0xff] %v290
        $region44: #{forward.1} parent=35 // pred_fallthru
          _
        %p295 = scmp.lt.s32.totalorder %s22, 0
        %s296 = ssub.s32 0, %s22
        %s297 = scalar_select %p295, %s296, %s22
        %s298 = sand.u32 %s297, 1
        %s299 = ssub.s32 0, %s298
        %s300 = scalar_select %p295, %s299, %s298
        %p301 = scmp.ne.s32.totalorder %s300, 0
        %p302 = scmp.lt.s32.totalorder %s300, 0
        %p303 = pnand %p302, %p301
        %p304 = pneg %p303
        %s305 = sadd.s32 %s300, 2
        %s306 = scalar_select %p304, %s305, %s300
        %s307 = sadd.s32 %s22, 1
        %p308 = scmp.lt.s32.totalorder %s307, 0
        %s309 = ssub.s32 0, %s307
        %s310 = scalar_select %p308, %s309, %s307
        %s311 = sand.u32 %s310, 1
        %s312 = ssub.s32 0, %s311
        %s313 = scalar_select %p308, %s312, %s311
        %p314 = scmp.ne.s32.totalorder %s313, 0
        %p315 = scmp.lt.s32.totalorder %s313, 0
        %p316 = pnand %p315, %p314
        %p317 = pneg %p316
        %s318 = sadd.s32 %s313, 2
        %s319 = scalar_select %p317, %s318, %s313
        %v320 = vld [vmem:[%s270] sm:$0xff]
        %v321 = vld [vmem:[%s270 + $0x8] sm:$0xff]
        %v322 = vld [vmem:[%s270 + $0x10] sm:$0xff]
        %v323 = vld [vmem:[%s270 + $0x18] sm:$0xff]
        %s324 = smul.u32 %s306, 32
        %s325 = scalar_lea.vmem [#allocation2], %s324
        %v326 = vld [vmem:[%s325] sm:$0xff]
        %v327 = vld [vmem:[%s325 + $0x8] sm:$0xff]
        %v328 = vld [vmem:[%s325 + $0x10] sm:$0xff]
        %v329 = vld [vmem:[%s325 + $0x18] sm:$0xff]
        %vm330 = vcmask 261120
        %v332 = vsel %vm330, %v320, 0
        %v335 = vsel %vm330, %v321, 0
        %v338 = vsel %vm330, %v322, 0
        %v341 = vsel %vm330, %v323, 0
        %343 = vmatprep.subr.mxu0 0.0
        %344 = vmatpush1.msra.mxu0 %v326
        %345 = vmatprep.subr.mxu0 0.0
        %346 = vmatpush1.msra.mxu0 %v327
        %347 = vmatprep.subr.mxu0 0.0
        %348 = vmatpush1.msra.mxu0 %v328
        %349 = vmatprep.subr.mxu0 0.0
        %350 = vmatpush1.msra.mxu0 %v329
        %351 = vmatprep.subr.mxu0 0.0
        %352 = vmatpush1.msra.mxu0 0.0
        %353 = vmatprep.subr.mxu0 0.0
        %354 = vmatpush1.msra.mxu0 0.0
        %355 = vmatprep.subr.mxu0 0.0
        %356 = vmatpush1.msra.mxu0 0.0
        %357 = vmatprep.subr.mxu0 0.0
        %358 = vmatpush1.msra.mxu0 0.0
        %359 = vmatprep.subr.mxu0 0.0
        %360 = vmatpush1.msra.mxu0 0.0
        %361 = vmatprep.subr.mxu0 0.0
        %362 = vmatpush1.msra.mxu0 0.0
        %363 = vmatprep.subr.mxu0 0.0
        %364 = vmatpush1.msra.mxu0 0.0
        %365 = vmatprep.subr.mxu0 0.0
        %366 = vmatpush1.msra.mxu0 0.0
        %367 = vmatprep.subr.mxu0 0.0
        %368 = vmatpush1.msra.mxu0 0.0
        %369 = vmatprep.subr.mxu0 0.0
        %370 = vmatpush1.msra.mxu0 0.0
        %371 = vmatprep.subr.mxu0 0.0
        %372 = vmatpush1.msra.mxu0 0.0
        %373 = vmatprep.subr.mxu0 0.0
        %374 = vmatpush1.msra.mxu0 0.0
        %375 = vmatprep.subr.mxu0 0.0
        %376 = vmatpush1.msra.mxu0 0.0
        %377 = vmatprep.subr.mxu0 0.0
        %378 = vmatpush1.msra.mxu0 0.0
        %379 = vmatprep.subr.mxu0 0.0
        %380 = vmatpush1.msra.mxu0 0.0
        %381 = vmatprep.subr.mxu0 0.0
        %382 = vmatpush1.msra.mxu0 0.0
        %383 = vmatprep.subr.mxu0 0.0
        %384 = vmatpush1.msra.mxu0 0.0
        %385 = vmatprep.subr.mxu0 0.0
        %386 = vmatpush1.msra.mxu0 0.0
        %387 = vmatprep.subr.mxu0 0.0
        %388 = vmatpush1.msra.mxu0 0.0
        %389 = vmatprep.subr.mxu0 0.0
        %390 = vmatpush1.msra.mxu0 0.0
        %391 = vmatprep.subr.mxu0 0.0
        %392 = vmatpush1.msra.mxu0 0.0
        %393 = vmatprep.subr.mxu0 0.0
        %394 = vmatpush1.msra.mxu0 0.0
        %395 = vmatprep.subr.mxu0 0.0
        %396 = vmatpush1.msra.mxu0 0.0
        %397 = vmatprep.subr.mxu0 0.0
        %398 = vmatpush1.msra.mxu0 0.0
        %399 = vmatprep.subr.mxu0 0.0
        %400 = vmatpush1.msra.mxu0 0.0
        %401 = vmatprep.subr.mxu0 0.0
        %402 = vmatpush1.msra.mxu0 0.0
        %403 = vmatprep.subr.mxu0 0.0
        %404 = vmatpush1.msra.mxu0 0.0
        %405 = vmatprep.subr.mxu0 0.0
        %406 = vmatpush1.msra.mxu0 0.0
        %407 = vmatprep.mubr.f32.mxu0 0.0
        %408 = vmatmul.mubr.f32.gmra.mrb[0].mxu0 %v332
        %v409 = vpop.f32.mrb[0].mxu0
        %v410 = vadd.f32 0.0, %v409
        %v411 = vpop.f32.mrb[0].mxu0
        %412 = vmatprep.mubr.f32.mxu0 0.0
        %413 = vmatmul.mubr.f32.gmra.mrb[0].mxu0 %v335
        %v414 = vpop.f32.mrb[0].mxu0
        %v415 = vadd.f32 0.0, %v414
        %v416 = vpop.f32.mrb[0].mxu0
        %417 = vmatprep.mubr.f32.mxu0 0.0
        %418 = vmatmul.mubr.f32.gmra.mrb[0].mxu0 %v338
        %v419 = vpop.f32.mrb[0].mxu0
        %v420 = vadd.f32 0.0, %v419
        %v421 = vpop.f32.mrb[0].mxu0
        %422 = vmatprep.mubr.f32.mxu0 0.0
        %423 = vmatmul.mubr.f32.gmra.mrb[0].mxu0 %v341
        %v424 = vpop.f32.mrb[0].mxu0
        %v425 = vadd.f32 0.0, %v424
        %v426 = vpop.f32.mrb[0].mxu0
        %427 = vdwg.mxu0
        %v428 = vld [vmem:[%s225] sm:$0xff]
        %v429 = vld [vmem:[%s225 + $0x8] sm:$0xff]
        %v430 = vld [vmem:[%s225 + $0x10] sm:$0xff]
        %v431 = vld [vmem:[%s225 + $0x18] sm:$0xff]
        %v432 = vld [vmem:[%s225 + $0x20] sm:$0xff]
        %v433 = vld [vmem:[%s225 + $0x28] sm:$0xff]
        %v434 = vld [vmem:[%s225 + $0x30] sm:$0xff]
        %v435 = vld [vmem:[%s225 + $0x38] sm:$0xff]
        %v436 = vld [vmem:[%s225 + $0x40] sm:$0xff]
        %v437 = vld [vmem:[%s225 + $0x48] sm:$0xff]
        %v438 = vld [vmem:[%s225 + $0x50] sm:$0xff]
        %v439 = vld [vmem:[%s225 + $0x58] sm:$0xff]
        %v440 = vld [vmem:[%s225 + $0x60] sm:$0xff]
        %v441 = vld [vmem:[%s225 + $0x68] sm:$0xff]
        %v442 = vld [vmem:[%s225 + $0x70] sm:$0xff]
        %v443 = vld [vmem:[%s225 + $0x78] sm:$0xff]
        %v444 = vld [vmem:[%s274] sm:$0x1]
        %v446 = vlaneseq
        %v447 = vshrl.u32 %v446, 7
        %v448 = vsub.s32 0, %v447
        %v449 = vrot.slane %v444, %v448
        %451 = vmatprep.subr.mxu0 0.0
        %452 = vmatpush1.msra.mxu0 %v428
        %453 = vmatprep.subr.mxu0 0.0
        %454 = vmatpush1.msra.mxu0 %v429
        %455 = vmatprep.subr.mxu0 0.0
        %456 = vmatpush1.msra.mxu0 %v430
        %457 = vmatprep.subr.mxu0 0.0
        %458 = vmatpush1.msra.mxu0 %v431
        %459 = vmatprep.subr.mxu0 0.0
        %460 = vmatpush1.msra.mxu0 %v432
        %461 = vmatprep.subr.mxu0 0.0
        %462 = vmatpush1.msra.mxu0 %v433
        %463 = vmatprep.subr.mxu0 0.0
        %464 = vmatpush1.msra.mxu0 %v434
        %465 = vmatprep.subr.mxu0 0.0
        %466 = vmatpush1.msra.mxu0 %v435
        %467 = vmatprep.subr.mxu0 0.0
        %468 = vmatpush1.msra.mxu0 %v436
        %469 = vmatprep.subr.mxu0 0.0
        %470 = vmatpush1.msra.mxu0 %v437
        %471 = vmatprep.subr.mxu0 0.0
        %472 = vmatpush1.msra.mxu0 %v438
        %473 = vmatprep.subr.mxu0 0.0
        %474 = vmatpush1.msra.mxu0 %v439
        %475 = vmatprep.subr.mxu0 0.0
        %476 = vmatpush1.msra.mxu0 %v440
        %477 = vmatprep.subr.mxu0 0.0
        %478 = vmatpush1.msra.mxu0 %v441
        %479 = vmatprep.subr.mxu0 0.0
        %480 = vmatpush1.msra.mxu0 %v442
        %481 = vmatprep.subr.mxu0 0.0
        %482 = vmatpush1.msra.mxu0 %v443
        %483 = vmatprep.subr.mxu0 0.0
        %484 = vmatpush1.msra.mxu0 0.0
        %485 = vmatprep.subr.mxu0 0.0
        %486 = vmatpush1.msra.mxu0 0.0
        %487 = vmatprep.subr.mxu0 0.0
        %488 = vmatpush1.msra.mxu0 0.0
        %489 = vmatprep.subr.mxu0 0.0
        %490 = vmatpush1.msra.mxu0 0.0
        %491 = vmatprep.subr.mxu0 0.0
        %492 = vmatpush1.msra.mxu0 0.0
        %493 = vmatprep.subr.mxu0 0.0
        %494 = vmatpush1.msra.mxu0 0.0
        %495 = vmatprep.subr.mxu0 0.0
        %496 = vmatpush1.msra.mxu0 0.0
        %497 = vmatprep.subr.mxu0 0.0
        %498 = vmatpush1.msra.mxu0 0.0
        %499 = vmatprep.subr.mxu0 0.0
        %500 = vmatpush1.msra.mxu0 0.0
        %501 = vmatprep.subr.mxu0 0.0
        %502 = vmatpush1.msra.mxu0 0.0
        %503 = vmatprep.subr.mxu0 0.0
        %504 = vmatpush1.msra.mxu0 0.0
        %505 = vmatprep.subr.mxu0 0.0
        %506 = vmatpush1.msra.mxu0 0.0
        %507 = vmatprep.subr.mxu0 0.0
        %508 = vmatpush1.msra.mxu0 0.0
        %509 = vmatprep.subr.mxu0 0.0
        %510 = vmatpush1.msra.mxu0 0.0
        %511 = vmatprep.subr.mxu0 0.0
        %512 = vmatpush1.msra.mxu0 0.0
        %513 = vmatprep.subr.mxu0 0.0
        %514 = vmatpush1.msra.mxu0 0.0
        %515 = vmatprep.mubr.f32.mxu0 0.0
        %516 = vmatmul.mubr.f32.gmra.mrb[0].mxu0 %v410
        %v517 = vpop.f32.mrb[0].mxu0
        %v518 = vadd.f32 %v449, %v517
        %v519 = vpop.f32.mrb[0].mxu0
        %520 = vmatprep.mubr.f32.mxu0 0.0
        %521 = vmatmul.mubr.f32.gmra.mrb[0].mxu0 %v415
        %v522 = vpop.f32.mrb[0].mxu0
        %v523 = vadd.f32 %v449, %v522
        %v524 = vpop.f32.mrb[0].mxu0
        %525 = vmatprep.mubr.f32.mxu0 0.0
        %526 = vmatmul.mubr.f32.gmra.mrb[0].mxu0 %v420
        %v527 = vpop.f32.mrb[0].mxu0
        %v528 = vadd.f32 %v449, %v527
        %v529 = vpop.f32.mrb[0].mxu0
        %530 = vmatprep.mubr.f32.mxu0 0.0
        %531 = vmatmul.mubr.f32.gmra.mrb[0].mxu0 %v425
        %v532 = vpop.f32.mrb[0].mxu0
        %v533 = vadd.f32 %v449, %v532
        %v534 = vpop.f32.mrb[0].mxu0
        %535 = vdwg.mxu0
        %p536 = scmp.lt.s32.totalorder %s22, 1
        // Predicated region
        $region45: #{forward.1} parent=35 // pred_check
          %p537 = pneg %p536
        $region46: #{forward.1} parent=35 // pred_check_branch
          %539 = sbr.rel (%p537) target = $region48
        $region47: #{forward.1} parent=35 // pred_region
          %s540 = smul.u32 %s23, 32
          %vm541 = vcmp.gt.f32.partialorder %v518, 0.0
          %vm542 = vcmp.gt.f32.partialorder %v523, 0.0
          %vm543 = vcmp.gt.f32.partialorder %v528, 0.0
          %vm544 = vcmp.gt.f32.partialorder %v533, 0.0
          %v545 = vmul.f32 %v518, 0.01
          %v546 = vmul.f32 %v523, 0.01
          %v547 = vmul.f32 %v528, 0.01
          %v548 = vmul.f32 %v533, 0.01
          %v549 = vsel %vm541, %v518, %v545
          %v550 = vsel %vm542, %v523, %v546
          %v551 = vsel %vm543, %v528, %v547
          %v552 = vsel %vm544, %v533, %v548
          %s553 = smul.u32 %s319, 32
          %s554 = sadd.s32 %s540, %s553
          %s555 = scalar_lea.vmem [#allocation2], %s554
          %556 = vst [vmem:[%s555] sm:$0xff] %v549
          %557 = vst [vmem:[%s555 + $0x8] sm:$0xff] %v550
          %558 = vst [vmem:[%s555 + $0x10] sm:$0xff] %v551
          %559 = vst [vmem:[%s555 + $0x18] sm:$0xff] %v552
        $region48: #{forward.1} parent=35 // pred_fallthru
          _
        %p560 = scmp.eq.s32.totalorder %s22, 1
        // Predicated region
        $region49: #{forward.1} parent=35 // pred_check
          %p561 = pneg %p560
        $region50: #{forward.1} parent=35 // pred_check_branch
          %563 = sbr.rel (%p561) target = $region52
        $region51: #{forward.1} parent=35 // pred_region
          %564 = vst [vmem:[%s279] sm:$0xff] %v518
          %565 = vst [vmem:[%s279 + $0x8] sm:$0xff] %v523
          %566 = vst [vmem:[%s279 + $0x10] sm:$0xff] %v528
          %567 = vst [vmem:[%s279 + $0x18] sm:$0xff] %v533
        $region52: #{forward.1} parent=35 // pred_fallthru
          _
        %s568 = smul.u32 4, %s23
        %p569 = scmp.lt.s32.totalorder %s568, 3
        %s570 = scalar_select %p569, %s568, 3
        %s571 = smul.addr %s570, 8
        %s572 = scalar_lea.vmem %s4, %s571
        // Predicated region
        $region53: #{forward.1} parent=35 // pred_check
          %p573 = pneg %p149
        $region54: #{forward.1} parent=35 // pred_check_branch
          %575 = sbr.rel (%p573) target = $region56
        $region55: #{forward.1} parent=35 // pred_region
          %s576 = smul.u32 4, %s23
        $region56: #{forward.1} parent=35 // pred_fallthru
          _
        // Predicated region
        $region57: #{forward.1} parent=35 // pred_check
          %p577 = pneg %p149
        $region58: #{forward.1} parent=35 // pred_check_branch
          %579 = sbr.rel (%p577) target = $region60
        $region59: #{forward.1} parent=35 // pred_region
          %s580 = smul.u32 4, %s23
          %p581 = scmp.lt.s32.totalorder %s580, 3
          %s582 = scalar_select %p581, %s580, 3
          %s583 = smul.addr %s582, 8
          %s584 = scalar_lea.vmem %s4, %s583
        $region60: #{forward.1} parent=35 // pred_fallthru
          _
      $region36: #{forward.1} parent=5 // pred_fallthru
        _
      %p585 = scmp.le.s32.totalorder 2, %s13
      // Predicated region
      $region61: #{forward.1} parent=5 // pred_check
        %p586 = pneg %p585
      $region62: #{forward.1} parent=5 // pred_check_branch
        %588 = sbr.rel (%p586) target = $region64
      $region63: #{forward.1} parent=5 // pred_region
        %s589 = ssub.s32 %s13, 2
      $region64: #{forward.1} parent=5 // pred_fallthru
        _
    $region6: #{forward.1} parent=1 // loop_footer
      %s17 = sadd.s32 1, %s13
    $region7: #{forward.1} parent=1 // loop_footer_branch
      %12 = sbr.rel target = $region3
    $region8: #{forward.1} parent=1 // loop_exit
      _
    %590 = vsyncpa [#allocation4], 1
    %s591 = scalar_lea.sflag [#allocation4], 1
    %592 = vsyncpa %s591, 1

</llo_original>
